<compile_context>
chip_gen: v7x
topology: tpu7x:2x2x1
jax: 0.10.0
libtpu: 0.0.40
codegen_flags: <defaults>
</compile_context>

<pallas_src>
import functools

import numpy as np
import jax
import jax.numpy as jnp
from jax.experimental import pallas as pl
from jax.experimental.pallas import tpu as pltpu


# ----------------------------------------------------------------------------
# Pallas kernel: fused gates + projection + norm-ratio gating for one row tile
# ----------------------------------------------------------------------------
def dot_attention_kernel(word_ref, va_ref, wslab_ref, gva_ref, wva_ref,
                         gate_b_ref, out_ref, *, vis_dim):
    word = word_ref[...].astype(jnp.float32)        # (tm, D)
    va = va_ref[...].astype(jnp.float32)            # (tm, Dv+Da)  = [vis | aud]

    wslab = wslab_ref[...].astype(jnp.float32)      # (5, D): gwv_w, gwa_w, bvp, bap, bias_const
    gva = gva_ref[...].astype(jnp.float32)          # (2, Dv+Da): [wvg_v|0], [0|wag_a]

    # Gates on VPU/XLU (mul + lane reduce) -- avoids thin (tm,D)@(D,1) MXU
    # matmuls that fill one output column but pay full push/drain cost.
    g_v = (jnp.sum(word * wslab[0:1, :], axis=-1, keepdims=True)
           + jnp.sum(va * gva[0:1, :], axis=-1, keepdims=True)
           + gate_b_ref[0])                          # (tm, 1)
    g_a = (jnp.sum(word * wslab[1:2, :], axis=-1, keepdims=True)
           + jnp.sum(va * gva[1:2, :], axis=-1, keepdims=True)
           + gate_b_ref[1])                          # (tm, 1)
    g_v = jnp.maximum(g_v, 0.0)
    g_a = jnp.maximum(g_a, 0.0)

    # Single full-K MXU matmul on the pre-scaled packed activations:
    #   [g_v*vis | g_a*aud] @ [wvp ; wap]  ==  g_v*(vis@wvp) + g_a*(aud@wap)
    lane = jax.lax.broadcasted_iota(jnp.int32, va.shape, 1)
    scale = jnp.where(lane < vis_dim, g_v, g_a)      # (tm, Dv+Da)
    h_m = (jnp.dot(scale * va, wva_ref[...].astype(jnp.float32),
                   preferred_element_type=jnp.float32)
           + g_v * wslab[2:3, :] + g_a * wslab[3:4, :] + wslab[4:5, :])

    # alpha = min(||word|| / ||h_m||, 1); rsqrt goes to the otherwise-idle EUP.
    word_sq = jnp.sum(word * word, axis=-1, keepdims=True)
    hm_sq = jnp.sum(h_m * h_m, axis=-1, keepdims=True)
    alpha = jnp.minimum(jnp.sqrt(word_sq) * jax.lax.rsqrt(hm_sq), 1.0)

    out_ref[...] = (word + alpha * h_m).astype(out_ref.dtype)


# ----------------------------------------------------------------------------
# Wrapper
# ----------------------------------------------------------------------------
def _round_up(x, m):
    return ((x + m - 1) // m) * m


def _lane_pad(c):
    return _round_up(c, 128)


def _is_v7x():
    try:
        kind = jax.devices()[0].device_kind.lower()
    except Exception:
        return False
    return ("v7" in kind) or ("7x" in kind)


def dot_attention(input_emb, input_audio, input_visual, params, *, tm=None):
    N, Tfull, D = input_emb.shape
    T = Tfull - 1
    Dv = input_visual.shape[-1]
    Da = input_audio.shape[-1]
    Dva = Dv + Da
    M = N * T

    cls_emb = input_emb[:, 0, :]                                     # (N, D)
    word = input_emb[:, 1:, :].reshape(M, D)
    # Pack [visual | audio] into one lane-dense stream (single DMA stream,
    # no half-utilized 64-lane tiles), matching the stacked [wvp; wap] weight.
    va = jnp.concatenate([input_visual[:, 1:, :], input_audio[:, 1:, :]],
                         axis=-1).reshape(M, Dva)

    in_item = jnp.dtype(word.dtype).itemsize
    out_item = jnp.dtype(input_emb.dtype).itemsize

    is_v7x = _is_v7x()
    if tm is None:
        tm = 2048 if is_v7x else 1024

    granule = 16  # sublane tile for bf16 rows; also a multiple of 8 for f32
    # Per-row VMEM bytes with the last dim padded to 128 lanes (Mosaic tiling).
    row_bytes = _lane_pad(D) * (in_item + out_item) + _lane_pad(Dva) * in_item
    vmem_row_budget = 24 * (1 << 20)                 # for double-buffered row tiles
    tm_cap = max(granule, (vmem_row_budget // (2 * row_bytes)) // granule * granule)
    tm = max(granule, min(_round_up(min(tm, tm_cap), granule), _round_up(M, granule)))
    if is_v7x and M > granule:
        # Guarantee >=2 grid steps so both TensorCores get work.
        tm = min(tm, _round_up(-(-M // 2), granule))

    # Pad M to a multiple of tm (keeps pipelining; padded rows give alpha=0
    # garbage that is sliced off below).
    M_pad = _round_up(M, tm)
    if M_pad != M:
        pad = M_pad - M
        word = jnp.pad(word, ((0, pad), (0, 0)))
        va = jnp.pad(va, ((0, pad), (0, 0)))
    grid = (M_pad // tm,)

    # VMEM budget: double-buffered row tiles + resident (lane-padded) weights.
    def tile_bytes(r, c, itemsize):
        return _round_up(r, 8) * _lane_pad(c) * itemsize

    weight_bytes = (tile_bytes(5, D, 4) + tile_bytes(2, Dva, 4)
                    + tile_bytes(Dva, D, 4))
    vmem_needed = 2 * tm * row_bytes + 2 * weight_bytes + (2 << 20)
    # >=32 MiB (v5e's default scoped VMEM is 16 MiB) but never claim the full
    # 64 MiB physical VMEM of v7x.
    vmem_limit = int(min(max(vmem_needed, 32 << 20), 48 << 20))

    # --- parameter packing (wrapper-side, tiny) ------------------------------
    f32 = jnp.float32
    wslab = jnp.concatenate(
        [params["wvg_w"].T, params["wag_w"].T,
         params["bvp"], params["bap"], params["bias_const"]], axis=0).astype(f32)   # (5, D)
    gva = jnp.concatenate(
        [jnp.concatenate([params["wvg_v"].T, jnp.zeros((1, Da), f32)], axis=1),
         jnp.concatenate([jnp.zeros((1, Dv), f32), params["wag_a"].T], axis=1)],
        axis=0).astype(f32)                                                          # (2, Dva)
    wva = jnp.concatenate([params["wvp"], params["wap"]], axis=0).astype(f32)        # (Dva, D)
    gate_b = jnp.concatenate([params["bvg"].reshape(-1),
                              params["bag"].reshape(-1)]).astype(f32)                # (2,)

    kernel = functools.partial(dot_attention_kernel, vis_dim=Dv)

    out_pad = pl.pallas_call(
        kernel,
        out_shape=jax.ShapeDtypeStruct((M_pad, D), input_emb.dtype),
        grid_spec=pltpu.PrefetchScalarGridSpec(
            num_scalar_prefetch=0,
            grid=grid,
            in_specs=[
                pl.BlockSpec((tm, D), lambda i: (i, 0)),        # word rows
                pl.BlockSpec((tm, Dva), lambda i: (i, 0)),      # [vis|aud] rows
                pl.BlockSpec((5, D), lambda i: (0, 0)),         # gate word-w + biases
                pl.BlockSpec((2, Dva), lambda i: (0, 0)),       # gate va weights
                pl.BlockSpec((Dva, D), lambda i: (0, 0)),       # stacked [wvp; wap]
                pl.BlockSpec(memory_space=pltpu.MemorySpace.SMEM),  # (2,) gate biases
            ],
            out_specs=pl.BlockSpec((tm, D), lambda i: (i, 0)),
        ),
        compiler_params=pltpu.CompilerParams(
            dimension_semantics=("parallel",),
            vmem_limit_bytes=vmem_limit),
    )(word, va, wslab, gva, wva, gate_b)

    out_1 = out_pad[:M].reshape(N, T, D)
    return jnp.concatenate([cls_emb[:, None, :], out_1], axis=1)


# ----------------------------------------------------------------------------
# Pure-JAX reference (mirrors the PyTorch forward exactly, in f32)
# ----------------------------------------------------------------------------
def dot_attention_ref(input_emb, input_audio, input_visual, params):
    input_emb = input_emb.astype(jnp.float32)
    input_audio = input_audio.astype(jnp.float32)
    input_visual = input_visual.astype(jnp.float32)

    cls_emb = input_emb[:, 0, :]
    word = input_emb[:, 1:, :]
    vis = input_visual[:, 1:, :]
    aud = input_audio[:, 1:, :]

    g_v = jax.nn.relu(jnp.einsum('ntd,do->nto', word, params["wvg_w"])
                      + jnp.einsum('ntd,do->nto', vis, params["wvg_v"])
                      + params["bvg"])
    g_a = jax.nn.relu(jnp.einsum('ntd,do->nto', word, params["wag_w"])
                      + jnp.einsum('ntd,do->nto', aud, params["wag_a"])
                      + params["bag"])
    v_hidden = jnp.einsum('ntv,vd->ntd', vis, params["wvp"]) + params["bvp"]
    a_hidden = jnp.einsum('nta,ad->ntd', aud, params["wap"]) + params["bap"]

    h_m = g_v * v_hidden + g_a * a_hidden + params["bias_const"][None]
    ratio = (jnp.linalg.norm(word, axis=-1, keepdims=True)
             / jnp.linalg.norm(h_m, axis=-1, keepdims=True))
    alpha = jnp.minimum(ratio, 1.0)
    out_1 = word + alpha * h_m
    return jnp.concatenate([cls_emb[:, None, :], out_1], axis=1)


# ----------------------------------------------------------------------------
# Deterministic parameter init (shapes implied by DotAttention.__init__)
# ----------------------------------------------------------------------------
def init_params(key, hidden, visual_dim, audio_dim):
    ks = jax.random.split(key, 8)

    def unif(k, shape, fan_in):
        bound = 1.0 / np.sqrt(fan_in)
        return jax.random.uniform(k, shape, jnp.float32, -bound, bound)

    # nn.Linear(hidden + visual_dim, 1): weight split into word / visual parts
    wvg = unif(ks[0], (hidden + visual_dim, 1), hidden + visual_dim)
    wag = unif(ks[1], (hidden + audio_dim, 1), hidden + audio_dim)
    return {
        "wvg_w": wvg[:hidden, :],
        "wvg_v": wvg[hidden:, :],
        "bvg": unif(ks[2], (1, 1), hidden + visual_dim),
        "wag_w": wag[:hidden, :],
        "wag_a": wag[hidden:, :],
        "bag": unif(ks[3], (1, 1), hidden + audio_dim),
        "wvp": unif(ks[4], (visual_dim, hidden), visual_dim),
        "bvp": unif(ks[5], (1, hidden), visual_dim),
        "wap": unif(ks[6], (audio_dim, hidden), audio_dim),
        "bap": unif(ks[7], (1, hidden), audio_dim),
        "bias_const": jnp.full((1, hidden), 0.001, jnp.float32),
    }


if __name__ == "__main__":
    # SEQ = 1 CLS token + 8 word tokens. HIDDEN=128 and VDIM+ADIM=128 keep all
    # row streams and the output lane-dense (last dim multiple of 128).
    N, SEQ, HIDDEN, VDIM, ADIM = 2, 9, 128, 64, 64

    key = jax.random.PRNGKey(0)
    k_emb, k_aud, k_vis, k_par = jax.random.split(key, 4)
    input_emb = jax.random.normal(k_emb, (N, SEQ, HIDDEN), jnp.float32)
    input_audio = jax.random.normal(k_aud, (N, SEQ, ADIM), jnp.float32)
    input_visual = jax.random.normal(k_vis, (N, SEQ, VDIM), jnp.float32)
    params = init_params(k_par, HIDDEN, VDIM, ADIM)

    # f32 path: exact module semantics; the fused pre-scaled matmul plus the
    # TPU's default matmul precision means ~1e-3 level deviations, so compare
    # at 1e-2 instead of 1e-5.
    out_f32 = jax.block_until_ready(
        dot_attention(input_emb, input_audio, input_visual, params))
    ref_f32 = dot_attention_ref(input_emb, input_audio, input_visual, params)
    np.testing.assert_allclose(np.asarray(out_f32, np.float32),
                               np.asarray(ref_f32), rtol=1e-2, atol=1e-2)

    # bf16-streamed path (the recommended production config: ~2x fewer HBM
    # bytes).  Compared against the f32 reference on the bf16-rounded inputs
    # with a correspondingly relaxed tolerance (output is stored as bf16).
    emb_bf = input_emb.astype(jnp.bfloat16)
    aud_bf = input_audio.astype(jnp.bfloat16)
    vis_bf = input_visual.astype(jnp.bfloat16)
    out_bf = jax.block_until_ready(dot_attention(emb_bf, aud_bf, vis_bf, params))
    ref_bf = dot_attention_ref(emb_bf, aud_bf, vis_bf, params)
    np.testing.assert_allclose(np.asarray(out_bf, np.float32),
                               np.asarray(ref_bf), rtol=2e-2, atol=2e-2)

    print("KERNEL_OK")
</pallas_src>

<mosaic_0001>
module attributes {stable_mosaic.version = 11 : i64} {
  func.func @dot_attention_kernel(%arg0: i32, %arg1: memref<16x128xf32, #tpu.memory_space<vmem>>, %arg2: memref<16x128xf32, #tpu.memory_space<vmem>>, %arg3: memref<5x128xf32, #tpu.memory_space<vmem>>, %arg4: memref<2x128xf32, #tpu.memory_space<vmem>>, %arg5: memref<128x128xf32, #tpu.memory_space<vmem>>, %arg6: memref<2xf32, #tpu.memory_space<smem>>, %arg7: memref<16x128xf32, #tpu.memory_space<vmem>>) attributes {dimension_semantics = [#tpu.dimension_semantics<parallel>], iteration_bounds = array<i64: 1>, scalar_prefetch = 0 : i64, scratch_operands = 0 : i64, tpu.core_type = #tpu.core_type<tc>, window_params = [{transform_indices = @transform_0, window_bounds = array<i64: 16, 128>}, {transform_indices = @transform_1, window_bounds = array<i64: 16, 128>}, {pipeline_mode = #tpu.pipeline_mode<synchronous>, transform_indices = @transform_2, window_bounds = array<i64: 5, 128>}, {pipeline_mode = #tpu.pipeline_mode<synchronous>, transform_indices = @transform_3, window_bounds = array<i64: 2, 128>}, {pipeline_mode = #tpu.pipeline_mode<synchronous>, transform_indices = @transform_4, window_bounds = array<i64: 128, 128>}, {transform_indices = @transform_5, window_bounds = array<i64: 2>}, {transform_indices = @transform_6, window_bounds = array<i64: 16, 128>}]} {
    %c0 = arith.constant 0 : index
    %c0_0 = arith.constant 0 : index
    %0 = vector.load %arg1[%c0, %c0_0] : memref<16x128xf32, #tpu.memory_space<vmem>>, vector<16x128xf32>
    %c0_1 = arith.constant 0 : index
    %c0_2 = arith.constant 0 : index
    %1 = vector.load %arg2[%c0_1, %c0_2] : memref<16x128xf32, #tpu.memory_space<vmem>>, vector<16x128xf32>
    %c0_3 = arith.constant 0 : index
    %c0_4 = arith.constant 0 : index
    %2 = vector.load %arg3[%c0_3, %c0_4] : memref<5x128xf32, #tpu.memory_space<vmem>>, vector<5x128xf32>
    %c0_5 = arith.constant 0 : index
    %c0_6 = arith.constant 0 : index
    %3 = vector.load %arg4[%c0_5, %c0_6] : memref<2x128xf32, #tpu.memory_space<vmem>>, vector<2x128xf32>
    %4 = vector.extract_strided_slice %2 {offsets = [0, 0], sizes = [1, 128], strides = [1, 1]} : vector<5x128xf32> to vector<1x128xf32>
    %5 = vector.broadcast %4 : vector<1x128xf32> to vector<16x128xf32>
    %6 = arith.mulf %0, %5 : vector<16x128xf32>
    %cst = arith.constant dense<0.000000e+00> : vector<16xf32>
    %7 = vector.multi_reduction <add>, %6, %cst [1] : vector<16x128xf32> to vector<16xf32>
    %8 = vector.shape_cast %7 : vector<16xf32> to vector<16x1xf32>
    %9 = vector.extract_strided_slice %3 {offsets = [0, 0], sizes = [1, 128], strides = [1, 1]} : vector<2x128xf32> to vector<1x128xf32>
    %10 = vector.broadcast %9 : vector<1x128xf32> to vector<16x128xf32>
    %11 = arith.mulf %1, %10 : vector<16x128xf32>
    %cst_7 = arith.constant dense<0.000000e+00> : vector<16xf32>
    %12 = vector.multi_reduction <add>, %11, %cst_7 [1] : vector<16x128xf32> to vector<16xf32>
    %13 = vector.shape_cast %12 : vector<16xf32> to vector<16x1xf32>
    %14 = arith.addf %8, %13 : vector<16x1xf32>
    %c0_8 = arith.constant 0 : index
    %15 = memref.load %arg6[%c0_8] : memref<2xf32, #tpu.memory_space<smem>>
    %16 = vector.broadcast %15 : f32 to vector<16x1xf32>
    %17 = arith.addf %14, %16 : vector<16x1xf32>
    %18 = vector.extract_strided_slice %2 {offsets = [1, 0], sizes = [1, 128], strides = [1, 1]} : vector<5x128xf32> to vector<1x128xf32>
    %19 = vector.broadcast %18 : vector<1x128xf32> to vector<16x128xf32>
    %20 = arith.mulf %0, %19 : vector<16x128xf32>
    %cst_9 = arith.constant dense<0.000000e+00> : vector<16xf32>
    %21 = vector.multi_reduction <add>, %20, %cst_9 [1] : vector<16x128xf32> to vector<16xf32>
    %22 = vector.shape_cast %21 : vector<16xf32> to vector<16x1xf32>
    %23 = vector.extract_strided_slice %3 {offsets = [1, 0], sizes = [1, 128], strides = [1, 1]} : vector<2x128xf32> to vector<1x128xf32>
    %24 = vector.broadcast %23 : vector<1x128xf32> to vector<16x128xf32>
    %25 = arith.mulf %1, %24 : vector<16x128xf32>
    %cst_10 = arith.constant dense<0.000000e+00> : vector<16xf32>
    %26 = vector.multi_reduction <add>, %25, %cst_10 [1] : vector<16x128xf32> to vector<16xf32>
    %27 = vector.shape_cast %26 : vector<16xf32> to vector<16x1xf32>
    %28 = arith.addf %22, %27 : vector<16x1xf32>
    %c1 = arith.constant 1 : index
    %29 = memref.load %arg6[%c1] : memref<2xf32, #tpu.memory_space<smem>>
    %30 = vector.broadcast %29 : f32 to vector<16x1xf32>
    %31 = arith.addf %28, %30 : vector<16x1xf32>
    %cst_11 = arith.constant 0.000000e+00 : f32
    %32 = vector.broadcast %cst_11 : f32 to vector<16x1xf32>
    %33 = arith.maximumf %17, %32 : vector<16x1xf32>
    %cst_12 = arith.constant 0.000000e+00 : f32
    %34 = vector.broadcast %cst_12 : f32 to vector<16x1xf32>
    %35 = arith.maximumf %31, %34 : vector<16x1xf32>
    %36 = tpu.iota {dimensions = array<i32: 1>} : vector<16x128xi32>
    %c64_i32 = arith.constant 64 : i32
    %37 = vector.broadcast %c64_i32 : i32 to vector<16x128xi32>
    %38 = arith.cmpi slt, %36, %37 : vector<16x128xi32>
    %39 = vector.shape_cast %33 : vector<16x1xf32> to vector<16x1xf32>
    %40 = vector.broadcast %39 : vector<16x1xf32> to vector<16x128xf32>
    %41 = vector.shape_cast %35 : vector<16x1xf32> to vector<16x1xf32>
    %42 = vector.broadcast %41 : vector<16x1xf32> to vector<16x128xf32>
    %43 = arith.select %38, %40, %42 : vector<16x128xi1>, vector<16x128xf32>
    %44 = arith.mulf %43, %1 : vector<16x128xf32>
    %c0_13 = arith.constant 0 : index
    %c0_14 = arith.constant 0 : index
    %45 = vector.load %arg5[%c0_13, %c0_14] : memref<128x128xf32, #tpu.memory_space<vmem>>, vector<128x128xf32>
    %cst_15 = arith.constant dense<0.000000e+00> : vector<16x128xf32>
    %46 = tpu.matmul %44, %45, %cst_15 {dimension_numbers = #tpu.dot_dimension_numbers<[1], [0], [0], [1], [0, 0, 1, 1], [], []>} : vector<16x128xf32>, vector<128x128xf32>, vector<16x128xf32> -> vector<16x128xf32>
    %47 = vector.extract_strided_slice %2 {offsets = [2, 0], sizes = [1, 128], strides = [1, 1]} : vector<5x128xf32> to vector<1x128xf32>
    %48 = vector.broadcast %33 : vector<16x1xf32> to vector<16x128xf32>
    %49 = vector.broadcast %47 : vector<1x128xf32> to vector<16x128xf32>
    %50 = arith.mulf %48, %49 : vector<16x128xf32>
    %51 = arith.addf %46, %50 : vector<16x128xf32>
    %52 = vector.extract_strided_slice %2 {offsets = [3, 0], sizes = [1, 128], strides = [1, 1]} : vector<5x128xf32> to vector<1x128xf32>
    %53 = vector.broadcast %35 : vector<16x1xf32> to vector<16x128xf32>
    %54 = vector.broadcast %52 : vector<1x128xf32> to vector<16x128xf32>
    %55 = arith.mulf %53, %54 : vector<16x128xf32>
    %56 = arith.addf %51, %55 : vector<16x128xf32>
    %57 = vector.extract_strided_slice %2 {offsets = [4, 0], sizes = [1, 128], strides = [1, 1]} : vector<5x128xf32> to vector<1x128xf32>
    %58 = vector.broadcast %57 : vector<1x128xf32> to vector<16x128xf32>
    %59 = arith.addf %56, %58 : vector<16x128xf32>
    %60 = arith.mulf %0, %0 : vector<16x128xf32>
    %cst_16 = arith.constant dense<0.000000e+00> : vector<16xf32>
    %61 = vector.multi_reduction <add>, %60, %cst_16 [1] : vector<16x128xf32> to vector<16xf32>
    %62 = vector.shape_cast %61 : vector<16xf32> to vector<16x1xf32>
    %63 = arith.mulf %59, %59 : vector<16x128xf32>
    %cst_17 = arith.constant dense<0.000000e+00> : vector<16xf32>
    %64 = vector.multi_reduction <add>, %63, %cst_17 [1] : vector<16x128xf32> to vector<16xf32>
    %65 = vector.shape_cast %64 : vector<16xf32> to vector<16x1xf32>
    %66 = math.sqrt %62 : vector<16x1xf32>
    %67 = math.rsqrt %65 : vector<16x1xf32>
    %68 = arith.mulf %66, %67 : vector<16x1xf32>
    %cst_18 = arith.constant 1.000000e+00 : f32
    %69 = vector.broadcast %cst_18 : f32 to vector<16x1xf32>
    %70 = arith.minimumf %68, %69 : vector<16x1xf32>
    %71 = vector.broadcast %70 : vector<16x1xf32> to vector<16x128xf32>
    %72 = arith.mulf %71, %59 : vector<16x128xf32>
    %73 = arith.addf %0, %72 : vector<16x128xf32>
    %c0_19 = arith.constant 0 : index
    %c0_20 = arith.constant 0 : index
    %74 = vector.load %arg7[%c0_19, %c0_20] : memref<16x128xf32, #tpu.memory_space<vmem>>, vector<16x128xf32>
    tpu.vector_store %arg7[%c0_19, %c0_20], %73 {strides = array<i32>} : memref<16x128xf32, #tpu.memory_space<vmem>>, vector<16x128xf32>,
    return
  }
  func.func @transform_0(%arg0: i32) -> (i32, i32) {
    %c0_i32 = arith.constant 0 : i32
    %c0_i32_0 = arith.constant 0 : i32
    return %arg0, %c0_i32 : i32, i32
  }
  func.func @transform_1(%arg0: i32) -> (i32, i32) {
    %c0_i32 = arith.constant 0 : i32
    %c0_i32_0 = arith.constant 0 : i32
    return %arg0, %c0_i32 : i32, i32
  }
  func.func @transform_2(%arg0: i32) -> (i32, i32) {
    %c0_i32 = arith.constant 0 : i32
    %c0_i32_0 = arith.constant 0 : i32
    %c0_i32_1 = arith.constant 0 : i32
    return %c0_i32, %c0_i32_0 : i32, i32
  }
  func.func @transform_3(%arg0: i32) -> (i32, i32) {
    %c0_i32 = arith.constant 0 : i32
    %c0_i32_0 = arith.constant 0 : i32
    %c0_i32_1 = arith.constant 0 : i32
    return %c0_i32, %c0_i32_0 : i32, i32
  }
  func.func @transform_4(%arg0: i32) -> (i32, i32) {
    %c0_i32 = arith.constant 0 : i32
    %c0_i32_0 = arith.constant 0 : i32
    %c0_i32_1 = arith.constant 0 : i32
    return %c0_i32, %c0_i32_0 : i32, i32
  }
  func.func @transform_5(%arg0: i32) -> i32 {
    %c0_i32 = arith.constant 0 : i32
    %c0_i32_0 = arith.constant 0 : i32
    return %c0_i32 : i32
  }
  func.func @transform_6(%arg0: i32) -> (i32, i32) {
    %c0_i32 = arith.constant 0 : i32
    %c0_i32_0 = arith.constant 0 : i32
    return %arg0, %c0_i32 : i32, i32
  }
}

</mosaic_0001>

<llo_original>
// kernel: tpu_custom_call.1
$region0: #{tpu_custom_call.1}
  #allocation0 [shape = 'u32[]', space=smem, size = 0x4, offset = 0x4, fixed_abs, tag = 'smem constant byte address 0x4 - core index']
  #allocation1 [shape = 'u32[144,128]{1,0:T(1,128)}', space=vmem, size = 0x12000, scoped, tag = 'internal scratch']
  %s0 = inlined_call_operand.hbm [shape: f32[16,128], index: 0, kind: input, shape index: {}]
  %s1 = inlined_call_operand.hbm [shape: f32[16,128], index: 1, kind: input, shape index: {}]
  %s2 = inlined_call_operand.hbm [shape: f32[5,128], index: 2, kind: input, shape index: {}]
  %s3 = inlined_call_operand.vmem [shape: f32[2,128], index: 3, kind: input, shape index: {}]
  %s4 = inlined_call_operand.hbm [shape: f32[128,128], index: 4, kind: input, shape index: {}]
  %s5 = inlined_call_operand.vmem [shape: f32[2], index: 5, kind: input, shape index: {}]
  %s6 = inlined_call_operand.hbm [shape: f32[16,128], index: 6, kind: output, shape index: {}]
  %s7 = sld [smem:[#allocation0]]
  $region54: #{tpu_custom_call.1} parent=0
    _
  %s9 = ssub.s32 1, %s7
  %s10 = scalar_select 0, %s9, %s7
  $region1: #{tpu_custom_call.1} parent=0
    #allocation2 [shape = 'u8[8192]{0}', space=vmem, size = 0x2000, scoped, tag = 'input window, operand 0, single buffered']
    #allocation3 [shape = 's32[1]{0}', space=sflag, size = 0x4, scoped, tag = 'scoped memory for tpu_custom_call.1']
    #allocation4 [shape = 's32[1]{0}', space=sflag, size = 0x4, scoped, tag = 'scoped memory for tpu_custom_call.1']
    #allocation5 [shape = 's32[1]{0}', space=sflag, size = 0x4, scoped, tag = 'scoped memory for tpu_custom_call.1']
    #allocation6 [shape = 'u8[8192]{0}', space=vmem, size = 0x2000, scoped, tag = 'input window, operand 1, single buffered']
    #allocation7 [shape = 's32[1]{0}', space=sflag, size = 0x4, scoped, tag = 'scoped memory for tpu_custom_call.1']
    #allocation8 [shape = 'u8[4096]{0}', space=vmem, size = 0x1000, scoped, tag = 'input window, operand 2, single buffered']
    #allocation9 [shape = 'u8[65536]{0}', space=vmem, size = 0x10000, scoped, tag = 'input window, operand 4, single buffered']
    #allocation10 [shape = 's32[1]{0}', space=sflag, size = 0x4, scoped, tag = 'scoped memory for tpu_custom_call.1']
    #allocation11 [shape = 'u8[512]{0}', space=smem, size = 0x200, scoped, tag = 'input window, operand 5, single buffered']
    #allocation12 [shape = 'u8[8192]{0}', space=vmem, size = 0x2000, scoped, tag = 'output window, operand 0, single buffered']
    %11 = vsyncpa [#allocation3], 0
    %12 = vsyncpa [#allocation7], 0
    %13 = vsyncpa [#allocation10], 0
    %14 = vsyncpa [#allocation5], 0
    %15 = vsyncpa [#allocation4], 0
    // Predicated region
    $region2: #{tpu_custom_call.1} parent=1 // pred_check
      _
    $region3: #{tpu_custom_call.1} parent=1 // pred_check_branch
      %17 = sbr.rel (0) target = $region5
    $region4: #{tpu_custom_call.1} parent=1 // pred_region
      %s19 = ssub.s32 256, 256
      %20 = vsyncadd [#allocation3], %s19
      %s21 = sshll.u32 [#allocation2], 4
      %s22 = int_to_ptr.vmem [resolvable:$true] %s21
      %27 = dma.hbm_to_vmem [thread:$0]  %s0, 256, %s22, [#allocation3], 128, 128, 8
    $region5: #{tpu_custom_call.1} parent=1 // pred_fallthru
      _
    // Predicated region
    $region6: #{tpu_custom_call.1} parent=1 // pred_check
      _
    $region7: #{tpu_custom_call.1} parent=1 // pred_check_branch
      %29 = sbr.rel (0) target = $region9
    $region8: #{tpu_custom_call.1} parent=1 // pred_region
      %s31 = ssub.s32 256, 256
      %32 = vsyncadd [#allocation7], %s31
      %s33 = sshll.u32 [#allocation6], 4
      %s34 = int_to_ptr.vmem [resolvable:$true] %s33
      %39 = dma.hbm_to_vmem [thread:$0]  %s1, 256, %s34, [#allocation7], 128, 128, 8
    $region9: #{tpu_custom_call.1} parent=1 // pred_fallthru
      _
    // Predicated region
    $region10: #{tpu_custom_call.1} parent=1 // pred_check
      _
    $region11: #{tpu_custom_call.1} parent=1 // pred_check_branch
      %41 = sbr.rel (0) target = $region13
    $region12: #{tpu_custom_call.1} parent=1 // pred_region
      %s43 = ssub.s32 128, 128
      %44 = vsyncadd [#allocation7], %s43
      %s46 = sshll.u32 [#allocation8], 4
      %s47 = int_to_ptr.vmem [resolvable:$true] %s46
      %49 = dma.hbm_to_vmem [thread:$0]  %s2, 128, %s47, [#allocation7]
    $region13: #{tpu_custom_call.1} parent=1 // pred_fallthru
      _
    // Predicated region
    $region14: #{tpu_custom_call.1} parent=1 // pred_check
      _
    $region15: #{tpu_custom_call.1} parent=1 // pred_check_branch
      %51 = sbr.rel (0) target = $region17
    $region16: #{tpu_custom_call.1} parent=1 // pred_region
      _
    $region17: #{tpu_custom_call.1} parent=1 // pred_fallthru
      _
    // Predicated region
    $region18: #{tpu_custom_call.1} parent=1 // pred_check
      _
    $region19: #{tpu_custom_call.1} parent=1 // pred_check_branch
      %53 = sbr.rel (0) target = $region21
    $region20: #{tpu_custom_call.1} parent=1 // pred_region
      %s55 = ssub.s32 2048, 2048
      %56 = vsyncadd [#allocation10], %s55
      %s57 = sshll.u32 [#allocation9], 4
      %s58 = int_to_ptr.vmem [resolvable:$true] %s57
      %63 = dma.hbm_to_vmem [thread:$0]  %s4, 2048, %s58, [#allocation10], 128, 128, 8
    $region21: #{tpu_custom_call.1} parent=1 // pred_fallthru
      _
    // Predicated region
    $region22: #{tpu_custom_call.1} parent=1 // pred_check
      _
    $region23: #{tpu_custom_call.1} parent=1 // pred_check_branch
      %65 = sbr.rel (0) target = $region25
    $region24: #{tpu_custom_call.1} parent=1 // pred_region
      %s67 = ssub.s32 16, 16
      %68 = vsyncadd [#allocation5], %s67
      %s70 = sshll.u32 %s5, 4
      %s71 = int_to_ptr.vmem [resolvable:$true] %s70
      %73 = dma.vmem_to_smem %s71, 16, [#allocation11], [#allocation5]
    $region25: #{tpu_custom_call.1} parent=1 // pred_fallthru
      _
    // Predicated region
    $region26: #{tpu_custom_call.1} parent=1 // pred_check
      _
    $region27: #{tpu_custom_call.1} parent=1 // pred_check_branch
      %75 = sbr.rel (0) target = $region29
    $region28: #{tpu_custom_call.1} parent=1 // pred_region
      %76 = dma.done [#allocation3], 256
    $region29: #{tpu_custom_call.1} parent=1 // pred_fallthru
      _
    // Predicated region
    $region30: #{tpu_custom_call.1} parent=1 // pred_check
      _
    $region31: #{tpu_custom_call.1} parent=1 // pred_check_branch
      %78 = sbr.rel (0) target = $region33
    $region32: #{tpu_custom_call.1} parent=1 // pred_region
      %79 = dma.done [#allocation7], 256
    $region33: #{tpu_custom_call.1} parent=1 // pred_fallthru
      _
    // Predicated region
    $region34: #{tpu_custom_call.1} parent=1 // pred_check
      _
    $region35: #{tpu_custom_call.1} parent=1 // pred_check_branch
      %81 = sbr.rel (0) target = $region37
    $region36: #{tpu_custom_call.1} parent=1 // pred_region
      %82 = dma.done [#allocation7], 128
    $region37: #{tpu_custom_call.1} parent=1 // pred_fallthru
      _
    // Predicated region
    $region38: #{tpu_custom_call.1} parent=1 // pred_check
      _
    $region39: #{tpu_custom_call.1} parent=1 // pred_check_branch
      %84 = sbr.rel (0) target = $region41
    $region40: #{tpu_custom_call.1} parent=1 // pred_region
      %85 = dma.done [#allocation10], 2048
    $region41: #{tpu_custom_call.1} parent=1 // pred_fallthru
      _
    // Predicated region
    $region42: #{tpu_custom_call.1} parent=1 // pred_check
      _
    $region43: #{tpu_custom_call.1} parent=1 // pred_check_branch
      %87 = sbr.rel (0) target = $region45
    $region44: #{tpu_custom_call.1} parent=1 // pred_region
      %88 = dma.done [#allocation5], 16
    $region45: #{tpu_custom_call.1} parent=1 // pred_fallthru
      _
    %89 = sfence
    %v90 = vld [vmem:[#allocation2] sm:$0xff]
    %v91 = vld [vmem:[#allocation2 + $0x8] sm:$0xff]
    %v92 = vld [vmem:[#allocation6] sm:$0xff]
    %v93 = vld [vmem:[#allocation6 + $0x8] sm:$0xff]
    %v94 = vld [vmem:[#allocation8] sm:$0x1f]
    %v95 = vld [vmem:[%s3] sm:$0x3]
    %v96 = vlaneseq
    %v97 = vshrl.u32 %v96, 7
    %v98 = vsub.s32 0, %v97
    %v99 = vrot.slane %v94, %v98
    %v100 = vmul.f32 %v90, %v99
    %v101 = vmul.f32 %v91, %v99
    %102 = vadd.xlane.f32.xlu0 %v100
    %v103 = vpop.xlane.xlu0 %102
    %104 = vadd.xlane.f32.xlu0 %v101
    %v105 = vpop.xlane.xlu0 %104
    %v106 = vlaneseq
    %v107 = vshrl.u32 %v106, 7
    %v108 = vsub.s32 0, %v107
    %v109 = vrot.slane %v95, %v108
    %v110 = vmul.f32 %v92, %v109
    %v111 = vmul.f32 %v93, %v109
    %112 = vadd.xlane.f32.xlu0 %v110
    %v113 = vpop.xlane.xlu0 %112
    %114 = vadd.xlane.f32.xlu0 %v111
    %v115 = vpop.xlane.xlu0 %114
    %v116 = vadd.f32 %v103, %v113
    %v117 = vadd.f32 %v105, %v115
    %s118 = sld [smem:[#allocation11]]
    %v119 = vstv %s118
    %v120 = vadd.f32 %v116, %v119
    %v121 = vadd.f32 %v117, %v119
    %v122 = vlaneseq
    %v123 = vshrl.u32 %v122, 7
    %v124 = vsub.s32 1, %v123
    %v125 = vrot.slane %v94, %v124
    %v126 = vmul.f32 %v90, %v125
    %v127 = vmul.f32 %v91, %v125
    %128 = vadd.xlane.f32.xlu0 %v126
    %v129 = vpop.xlane.xlu0 %128
    %130 = vadd.xlane.f32.xlu0 %v127
    %v131 = vpop.xlane.xlu0 %130
    %v132 = vlaneseq
    %v133 = vshrl.u32 %v132, 7
    %v134 = vsub.s32 1, %v133
    %v135 = vrot.slane %v95, %v134
    %v136 = vmul.f32 %v92, %v135
    %v137 = vmul.f32 %v93, %v135
    %138 = vadd.xlane.f32.xlu0 %v136
    %v139 = vpop.xlane.xlu0 %138
    %140 = vadd.xlane.f32.xlu0 %v137
    %v141 = vpop.xlane.xlu0 %140
    %v142 = vadd.f32 %v129, %v139
    %v143 = vadd.f32 %v131, %v141
    %s144 = sld [smem:[#allocation11 + $0x1]]
    %v145 = vstv %s144
    %v146 = vadd.f32 %v142, %v145
    %v147 = vadd.f32 %v143, %v145
    %v148 = vmax.f32 %v120, 0.0
    %v149 = vmax.f32 %v121, 0.0
    %v150 = vmax.f32 %v146, 0.0
    %v151 = vmax.f32 %v147, 0.0
    %v152 = vlaneseq
    %v153 = vand.u32 %v152, 127
    %vm154 = vcmp.lt.s32.totalorder %v153, 64
    %v155 = vsel %vm154, %v148, %v150
    %v156 = vsel %vm154, %v149, %v151
    %v157 = vmul.f32 %v155, %v92
    %v158 = vmul.f32 %v156, %v93
    %v159 = vld [vmem:[#allocation9] sm:$0xff]
    %v160 = vld [vmem:[#allocation9 + $0x8] sm:$0xff]
    %v161 = vld [vmem:[#allocation9 + $0x10] sm:$0xff]
    %v162 = vld [vmem:[#allocation9 + $0x18] sm:$0xff]
    %v163 = vld [vmem:[#allocation9 + $0x20] sm:$0xff]
    %v164 = vld [vmem:[#allocation9 + $0x28] sm:$0xff]
    %v165 = vld [vmem:[#allocation9 + $0x30] sm:$0xff]
    %v166 = vld [vmem:[#allocation9 + $0x38] sm:$0xff]
    %v167 = vld [vmem:[#allocation9 + $0x40] sm:$0xff]
    %v168 = vld [vmem:[#allocation9 + $0x48] sm:$0xff]
    %v169 = vld [vmem:[#allocation9 + $0x50] sm:$0xff]
    %v170 = vld [vmem:[#allocation9 + $0x58] sm:$0xff]
    %v171 = vld [vmem:[#allocation9 + $0x60] sm:$0xff]
    %v172 = vld [vmem:[#allocation9 + $0x68] sm:$0xff]
    %v173 = vld [vmem:[#allocation9 + $0x70] sm:$0xff]
    %v174 = vld [vmem:[#allocation9 + $0x78] sm:$0xff]
    %v175 = vlaneseq
    %v176 = vshrl.u32 %v175, 7
    %v177 = vsub.s32 2, %v176
    %v178 = vrot.slane %v94, %v177
    %v179 = vmul.f32 %v148, %v178
    %v180 = vmul.f32 %v149, %v178
    %181 = vmatprep.subr.mxu0 0.0
    %182 = vmatpush1.msra.mxu0 %v159
    %183 = vmatprep.subr.mxu0 0.0
    %184 = vmatpush1.msra.mxu0 %v160
    %185 = vmatprep.subr.mxu0 0.0
    %186 = vmatpush1.msra.mxu0 %v161
    %187 = vmatprep.subr.mxu0 0.0
    %188 = vmatpush1.msra.mxu0 %v162
    %189 = vmatprep.subr.mxu0 0.0
    %190 = vmatpush1.msra.mxu0 %v163
    %191 = vmatprep.subr.mxu0 0.0
    %192 = vmatpush1.msra.mxu0 %v164
    %193 = vmatprep.subr.mxu0 0.0
    %194 = vmatpush1.msra.mxu0 %v165
    %195 = vmatprep.subr.mxu0 0.0
    %196 = vmatpush1.msra.mxu0 %v166
    %197 = vmatprep.subr.mxu0 0.0
    %198 = vmatpush1.msra.mxu0 %v167
    %199 = vmatprep.subr.mxu0 0.0
    %200 = vmatpush1.msra.mxu0 %v168
    %201 = vmatprep.subr.mxu0 0.0
    %202 = vmatpush1.msra.mxu0 %v169
    %203 = vmatprep.subr.mxu0 0.0
    %204 = vmatpush1.msra.mxu0 %v170
    %205 = vmatprep.subr.mxu0 0.0
    %206 = vmatpush1.msra.mxu0 %v171
    %207 = vmatprep.subr.mxu0 0.0
    %208 = vmatpush1.msra.mxu0 %v172
    %209 = vmatprep.subr.mxu0 0.0
    %210 = vmatpush1.msra.mxu0 %v173
    %211 = vmatprep.subr.mxu0 0.0
    %212 = vmatpush1.msra.mxu0 %v174
    %213 = vmatprep.subr.mxu0 0.0
    %214 = vmatpush1.msra.mxu0 0.0
    %215 = vmatprep.subr.mxu0 0.0
    %216 = vmatpush1.msra.mxu0 0.0
    %217 = vmatprep.subr.mxu0 0.0
    %218 = vmatpush1.msra.mxu0 0.0
    %219 = vmatprep.subr.mxu0 0.0
    %220 = vmatpush1.msra.mxu0 0.0
    %221 = vmatprep.subr.mxu0 0.0
    %222 = vmatpush1.msra.mxu0 0.0
    %223 = vmatprep.subr.mxu0 0.0
    %224 = vmatpush1.msra.mxu0 0.0
    %225 = vmatprep.subr.mxu0 0.0
    %226 = vmatpush1.msra.mxu0 0.0
    %227 = vmatprep.subr.mxu0 0.0
    %228 = vmatpush1.msra.mxu0 0.0
    %229 = vmatprep.subr.mxu0 0.0
    %230 = vmatpush1.msra.mxu0 0.0
    %231 = vmatprep.subr.mxu0 0.0
    %232 = vmatpush1.msra.mxu0 0.0
    %233 = vmatprep.subr.mxu0 0.0
    %234 = vmatpush1.msra.mxu0 0.0
    %235 = vmatprep.subr.mxu0 0.0
    %236 = vmatpush1.msra.mxu0 0.0
    %237 = vmatprep.subr.mxu0 0.0
    %238 = vmatpush1.msra.mxu0 0.0
    %239 = vmatprep.subr.mxu0 0.0
    %240 = vmatpush1.msra.mxu0 0.0
    %241 = vmatprep.subr.mxu0 0.0
    %242 = vmatpush1.msra.mxu0 0.0
    %243 = vmatprep.subr.mxu0 0.0
    %244 = vmatpush1.msra.mxu0 0.0
    %245 = vmatprep.mubr.f32.mxu0 0.0
    %246 = vmatmul.mubr.f32.gmra.mrb[0].mxu0 %v157
    %v247 = vpop.f32.mrb[0].mxu0
    %v248 = vadd.f32 %v179, %v247
    %v249 = vpop.f32.mrb[0].mxu0
    %250 = vmatprep.mubr.f32.mxu0 0.0
    %251 = vmatmul.mubr.f32.gmra.mrb[0].mxu0 %v158
    %v252 = vpop.f32.mrb[0].mxu0
    %v253 = vadd.f32 %v180, %v252
    %v254 = vpop.f32.mrb[0].mxu0
    %255 = vdwg.mxu0
    %v256 = vlaneseq
    %v257 = vshrl.u32 %v256, 7
    %v258 = vsub.s32 3, %v257
    %v259 = vrot.slane %v94, %v258
    %v260 = vmul.f32 %v150, %v259
    %v261 = vmul.f32 %v151, %v259
    %v262 = vadd.f32 %v248, %v260
    %v263 = vadd.f32 %v253, %v261
    %v264 = vlaneseq
    %v265 = vshrl.u32 %v264, 7
    %v266 = vsub.s32 4, %v265
    %v267 = vrot.slane %v94, %v266
    %v268 = vadd.f32 %v262, %v267
    %v269 = vadd.f32 %v263, %v267
    %v270 = vmul.f32 %v90, %v90
    %v271 = vmul.f32 %v91, %v91
    %272 = vadd.xlane.f32.xlu0 %v270
    %v273 = vpop.xlane.xlu0 %272
    %274 = vadd.xlane.f32.xlu0 %v271
    %v275 = vpop.xlane.xlu0 %274
    %v276 = vmul.f32 %v268, %v268
    %v277 = vmul.f32 %v269, %v269
    %278 = vadd.xlane.f32.xlu0 %v276
    %v279 = vpop.xlane.xlu0 %278
    %280 = vadd.xlane.f32.xlu0 %v277
    %v281 = vpop.xlane.xlu0 %280
    %v282 = vrsqrt.pop %v273
    %v283 = vmul.f32 %v273, %v282
    %vm284 = vcmp.eq.f32.partialorder %v273, inf
    %v285 = vsel %vm284, %v273, %v283
    %vm286 = vcmp.eq.f32.partialorder %v273, 0.0
    %v287 = vand.u32 %v273, 2147483648
    %v288 = vsel %vm286, %v287, %v285
    %v289 = vrsqrt.pop %v275
    %v290 = vmul.f32 %v275, %v289
    %vm291 = vcmp.eq.f32.partialorder %v275, inf
    %v292 = vsel %vm291, %v275, %v290
    %vm293 = vcmp.eq.f32.partialorder %v275, 0.0
    %v294 = vand.u32 %v275, 2147483648
    %v295 = vsel %vm293, %v294, %v292
    %v296 = vrsqrt.pop %v279
    %v297 = vrsqrt.pop %v281
    %v298 = vmul.f32 %v288, %v296
    %v299 = vmul.f32 %v295, %v297
    %v300 = vmin.f32 %v298, 1.0
    %v301 = vmin.f32 %v299, 1.0
    %v302 = vmul.f32 %v300, %v268
    %v303 = vmul.f32 %v301, %v269
    %v304 = vadd.f32 %v90, %v302
    %v305 = vadd.f32 %v91, %v303
    %306 = vst [vmem:[#allocation12] sm:$0xff] %v304
    %307 = vst [vmem:[#allocation12 + $0x8] sm:$0xff] %v305
    // Predicated region
    $region46: #{tpu_custom_call.1} parent=1 // pred_check
      _
    $region47: #{tpu_custom_call.1} parent=1 // pred_check_branch
      %309 = sbr.rel (0) target = $region49
    $region48: #{tpu_custom_call.1} parent=1 // pred_region
      %s311 = ssub.s32 256, 256
      %312 = vsyncadd [#allocation4], %s311
      %s313 = sshll.u32 [#allocation12], 4
      %s314 = int_to_ptr.vmem [resolvable:$true] %s313
      %319 = dma.vmem_to_hbm [thread:$0]  %s314, 256, %s6, [#allocation4], 128, 128, 8
    $region49: #{tpu_custom_call.1} parent=1 // pred_fallthru
      _
    // Predicated region
    $region50: #{tpu_custom_call.1} parent=1 // pred_check
      _
    $region51: #{tpu_custom_call.1} parent=1 // pred_check_branch
      %321 = sbr.rel (0) target = $region53
    $region52: #{tpu_custom_call.1} parent=1 // pred_region
      %322 = dma.done [#allocation4], 256
    $region53: #{tpu_custom_call.1} parent=1 // pred_fallthru
      _
    %323 = vsyncpa [#allocation3], 1
    %324 = vsyncpa [#allocation7], 1
    %325 = vsyncpa [#allocation10], 1
    %326 = vsyncpa [#allocation4], 1
    %327 = vsyncpa [#allocation5], 1

</llo_original>
